<compile_context>
chip_gen: v6e
topology: v6e:2x2x1
jax: 0.10.0
libtpu: 0.0.40
codegen_flags: <defaults>
</compile_context>

<pallas_src>
import functools
import math

import jax
import jax.numpy as jnp
from jax.experimental import pallas as pl
from jax.experimental.pallas import tpu as pltpu


def _conv_relu_kernel(x_ref, w_ref, b_ref, o_ref, col_ref, *,
                      kernel_size, word_dim):
    """One grid step = B samples flattened to M = B * r_len sequence rows.

    x_ref  : (M, word_dim)                      flattened rows for B samples
    w_ref  : (kernel_size*word_dim, F_pad)      im2col-layout weights
    b_ref  : (1, F_pad)                         zero-padded bias
    o_ref  : (M, F_pad)   rows t >= l_out inside a sample are garbage and are
                          sliced off by the wrapper
    col_ref: (M, kernel_size*word_dim)          VMEM scratch for im2col LHS
    """
    m = x_ref.shape[0]
    x = x_ref[...]
    if kernel_size > 1:
        # Zero tail (rounded to a sublane tile) so every shifted window has m
        # rows; the affected output rows are discarded by the wrapper anyway.
        pad_rows = ((kernel_size - 1 + 7) // 8) * 8
        x = jnp.concatenate(
            [x, jnp.zeros((pad_rows, word_dim), x.dtype)], axis=0)

    # im2col: lane block dk of the LHS holds the input shifted down by dk rows,
    # so a single (M, k*wd) @ (k*wd, F_pad) GEMM realizes the sliding-window
    # convolution for every sample in the tile at once.
    for dk in range(kernel_size):
        col_ref[:, dk * word_dim:(dk + 1) * word_dim] = x[dk:dk + m, :]

    acc = jnp.dot(col_ref[...], w_ref[...],
                  preferred_element_type=jnp.float32)
    acc = acc + b_ref[...]                      # (1, F_pad) broadcast over rows
    o_ref[...] = jnp.maximum(acc, 0.0).astype(o_ref.dtype)


def conv_forward(reviews, weight, bias, *, kernel_size, block_rows=512):
    """reviews: (bs, r_num, r_len, wd) float32
       weight : (filters_num, 1, kernel_size, wd)  (torch Conv2d layout)
       bias   : (filters_num,)
       returns: (bs * r_num, filters_num, r_len - kernel_size + 1)
    """
    bs, r_num, r_len, wd = reviews.shape
    filters_num = weight.shape[0]
    l_out = r_len - kernel_size + 1
    n = bs * r_num
    f_pad = ((filters_num + 127) // 128) * 128      # lane-dense output width

    # Samples per grid step: target ~block_rows matmul rows per step, while
    # keeping B*r_len a multiple of 8 (sublane tile) and not exceeding n.
    step = 8 // math.gcd(r_len, 8)
    b = max(1, block_rows // r_len)
    b = ((b + step - 1) // step) * step
    n_ceil = ((n + step - 1) // step) * step
    b = min(b, n_ceil)
    n_pad = ((n + b - 1) // b) * b

    x = reviews.reshape(n, r_len, wd)
    if n_pad != n:
        x = jnp.pad(x, ((0, n_pad - n), (0, 0), (0, 0)))
    x = x.reshape(n_pad * r_len, wd)                # free (metadata) reshape

    # (F, 1, k, wd) -> (k*wd, F) so LHS column dk*wd + d multiplies x[t+dk, d];
    # zero-pad the filter axis to f_pad lanes (bias too).
    w = weight[:, 0, :, :].reshape(filters_num, kernel_size * wd).T
    w = jnp.pad(w, ((0, 0), (0, f_pad - filters_num)))
    bvec = jnp.pad(bias, (0, f_pad - filters_num)).reshape(1, f_pad)

    m_blk = b * r_len
    kernel = functools.partial(
        _conv_relu_kernel, kernel_size=kernel_size, word_dim=wd)

    out = pl.pallas_call(
        kernel,
        out_shape=jax.ShapeDtypeStruct((n_pad * r_len, f_pad), jnp.float32),
        grid_spec=pltpu.PrefetchScalarGridSpec(
            num_scalar_prefetch=0,
            grid=(n_pad // b,),
            in_specs=[
                pl.BlockSpec((m_blk, wd), lambda i: (i, 0)),
                pl.BlockSpec((kernel_size * wd, f_pad), lambda i: (0, 0)),
                pl.BlockSpec((1, f_pad), lambda i: (0, 0)),
            ],
            out_specs=pl.BlockSpec((m_blk, f_pad), lambda i: (i, 0)),
            scratch_shapes=[
                pltpu.VMEM((m_blk, kernel_size * wd), jnp.float32)],
        ),
        compiler_params=pltpu.CompilerParams(
            dimension_semantics=("parallel",)),
    )(x, w, bvec)

    # (n_pad*r_len, F_pad) -> drop padded samples / garbage rows / padded lanes
    # and match torch's F.relu(conv(x).squeeze(3)) -> (N, F, L_out).
    # TODO(synk): if the consumer can take (N, L_out, F), drop this transpose
    # to save an HBM round trip.
    out = out.reshape(n_pad, r_len, f_pad)[:n, :l_out, :filters_num]
    return jnp.transpose(out, (0, 2, 1))


def _reference(reviews, weight, bias, *, kernel_size):
    bs, r_num, r_len, wd = reviews.shape
    l_out = r_len - kernel_size + 1
    x = reviews.reshape(-1, r_len, wd)
    w = weight[:, 0, :, :]                      # (F, k, wd)
    outs = []
    for t in range(l_out):
        patch = x[:, t:t + kernel_size, :]      # (N, k, wd)
        outs.append(jnp.einsum("nkd,fkd->nf", patch, w) + bias)
    out = jnp.stack(outs, axis=-1)              # (N, F, L_out)
    return jnp.maximum(out, 0.0)


if __name__ == "__main__":
    # opt: filters_num=32, kernel_size=3, word_dim=32
    bs, r_num, r_len, word_dim = 2, 4, 16, 32
    filters_num, kernel_size = 32, 3

    key = jax.random.PRNGKey(0)
    k_x, k_w, k_b = jax.random.split(key, 3)
    reviews = jax.random.normal(k_x, (bs, r_num, r_len, word_dim),
                                dtype=jnp.float32)
    weight = (jax.random.normal(
        k_w, (filters_num, 1, kernel_size, word_dim), dtype=jnp.float32)
        * 0.1)
    bias = jax.random.normal(k_b, (filters_num,), dtype=jnp.float32) * 0.1

    out = conv_forward(reviews, weight, bias, kernel_size=kernel_size)
    out = jax.block_until_ready(out)

    ref = _reference(reviews, weight, bias, kernel_size=kernel_size)
    assert out.shape == (bs * r_num, filters_num, r_len - kernel_size + 1)
    assert jnp.allclose(out, ref, atol=1e-4, rtol=1e-4)

    print("KERNEL_OK")
</pallas_src>

<mosaic_0001>
module attributes {stable_mosaic.version = 11 : i64} {
  func.func @_conv_relu_kernel(%arg0: i32, %arg1: memref<128x32xf32, #tpu.memory_space<vmem>>, %arg2: memref<96x128xf32, #tpu.memory_space<vmem>>, %arg3: memref<1x128xf32, #tpu.memory_space<vmem>>, %arg4: memref<128x128xf32, #tpu.memory_space<vmem>>, %arg5: memref<128x96xf32, #tpu.memory_space<vmem>>) attributes {dimension_semantics = [#tpu.dimension_semantics<parallel>], iteration_bounds = array<i64: 1>, scalar_prefetch = 0 : i64, scratch_operands = 1 : i64, tpu.core_type = #tpu.core_type<tc>, window_params = [{transform_indices = @transform_0, window_bounds = array<i64: 128, 32>}, {pipeline_mode = #tpu.pipeline_mode<synchronous>, transform_indices = @transform_1, window_bounds = array<i64: 96, 128>}, {pipeline_mode = #tpu.pipeline_mode<synchronous>, transform_indices = @transform_2, window_bounds = array<i64: 1, 128>}, {transform_indices = @transform_3, window_bounds = array<i64: 128, 128>}]} {
    %c0 = arith.constant 0 : index
    %c0_0 = arith.constant 0 : index
    %0 = vector.load %arg1[%c0, %c0_0] : memref<128x32xf32, #tpu.memory_space<vmem>>, vector<128x32xf32>
    %cst = arith.constant 0.000000e+00 : f32
    %1 = vector.broadcast %cst : f32 to vector<8x32xf32>
    %2 = tpu.concatenate %0, %1 in 0 : vector<128x32xf32>, vector<8x32xf32> -> vector<136x32xf32>
    %3 = vector.extract_strided_slice %2 {offsets = [0, 0], sizes = [128, 32], strides = [1, 1]} : vector<136x32xf32> to vector<128x32xf32>
    %c0_1 = arith.constant 0 : index
    %c0_2 = arith.constant 0 : index
    %4 = vector.load %arg5[%c0_1, %c0_2] : memref<128x96xf32, #tpu.memory_space<vmem>>, vector<128x32xf32>
    tpu.vector_store %arg5[%c0_1, %c0_2], %3 {strides = array<i32>} : memref<128x96xf32, #tpu.memory_space<vmem>>, vector<128x32xf32>,
    %5 = vector.extract_strided_slice %2 {offsets = [1, 0], sizes = [128, 32], strides = [1, 1]} : vector<136x32xf32> to vector<128x32xf32>
    %c0_3 = arith.constant 0 : index
    %c32 = arith.constant 32 : index
    %6 = vector.load %arg5[%c0_3, %c32] : memref<128x96xf32, #tpu.memory_space<vmem>>, vector<128x32xf32>
    tpu.vector_store %arg5[%c0_3, %c32], %5 {strides = array<i32>} : memref<128x96xf32, #tpu.memory_space<vmem>>, vector<128x32xf32>,
    %7 = vector.extract_strided_slice %2 {offsets = [2, 0], sizes = [128, 32], strides = [1, 1]} : vector<136x32xf32> to vector<128x32xf32>
    %c0_4 = arith.constant 0 : index
    %c64 = arith.constant 64 : index
    %8 = vector.load %arg5[%c0_4, %c64] : memref<128x96xf32, #tpu.memory_space<vmem>>, vector<128x32xf32>
    tpu.vector_store %arg5[%c0_4, %c64], %7 {strides = array<i32>} : memref<128x96xf32, #tpu.memory_space<vmem>>, vector<128x32xf32>,
    %c0_5 = arith.constant 0 : index
    %c0_6 = arith.constant 0 : index
    %9 = vector.load %arg5[%c0_5, %c0_6] : memref<128x96xf32, #tpu.memory_space<vmem>>, vector<128x96xf32>
    %c0_7 = arith.constant 0 : index
    %c0_8 = arith.constant 0 : index
    %10 = vector.load %arg2[%c0_7, %c0_8] : memref<96x128xf32, #tpu.memory_space<vmem>>, vector<96x128xf32>
    %cst_9 = arith.constant dense<0.000000e+00> : vector<128x128xf32>
    %11 = tpu.matmul %9, %10, %cst_9 {dimension_numbers = #tpu.dot_dimension_numbers<[1], [0], [0], [1], [0, 0, 1, 1], [], []>} : vector<128x96xf32>, vector<96x128xf32>, vector<128x128xf32> -> vector<128x128xf32>
    %c0_10 = arith.constant 0 : index
    %c0_11 = arith.constant 0 : index
    %12 = vector.load %arg3[%c0_10, %c0_11] : memref<1x128xf32, #tpu.memory_space<vmem>>, vector<1x128xf32>
    %13 = vector.broadcast %12 : vector<1x128xf32> to vector<128x128xf32>
    %14 = arith.addf %11, %13 : vector<128x128xf32>
    %cst_12 = arith.constant 0.000000e+00 : f32
    %15 = vector.broadcast %cst_12 : f32 to vector<128x128xf32>
    %16 = arith.maximumf %14, %15 : vector<128x128xf32>
    %c0_13 = arith.constant 0 : index
    %c0_14 = arith.constant 0 : index
    %17 = vector.load %arg4[%c0_13, %c0_14] : memref<128x128xf32, #tpu.memory_space<vmem>>, vector<128x128xf32>
    tpu.vector_store %arg4[%c0_13, %c0_14], %16 {strides = array<i32>} : memref<128x128xf32, #tpu.memory_space<vmem>>, vector<128x128xf32>,
    return
  }
  func.func @transform_0(%arg0: i32) -> (i32, i32) {
    %c0_i32 = arith.constant 0 : i32
    %c0_i32_0 = arith.constant 0 : i32
    return %arg0, %c0_i32 : i32, i32
  }
  func.func @transform_1(%arg0: i32) -> (i32, i32) {
    %c0_i32 = arith.constant 0 : i32
    %c0_i32_0 = arith.constant 0 : i32
    %c0_i32_1 = arith.constant 0 : i32
    return %c0_i32, %c0_i32_0 : i32, i32
  }
  func.func @transform_2(%arg0: i32) -> (i32, i32) {
    %c0_i32 = arith.constant 0 : i32
    %c0_i32_0 = arith.constant 0 : i32
    %c0_i32_1 = arith.constant 0 : i32
    return %c0_i32, %c0_i32_0 : i32, i32
  }
  func.func @transform_3(%arg0: i32) -> (i32, i32) {
    %c0_i32 = arith.constant 0 : i32
    %c0_i32_0 = arith.constant 0 : i32
    return %arg0, %c0_i32 : i32, i32
  }
}

</mosaic_0001>

<llo_original>
// kernel: tpu_custom_call.1
$region0: #{tpu_custom_call.1}
  #allocation0 [shape = 'u32[]', space=smem, size = 0x4, offset = 0x4, fixed_abs, tag = 'smem constant byte address 0x4 - core index']
  #allocation1 [shape = 'u32[144,128]{1,0:T(1,128)}', space=vmem, size = 0x12000, scoped, tag = 'internal scratch']
  #allocation2 [shape = 'f32[128,96]{1,0:T(8,128)}', space=vmem, size = 0x10000, scoped, tag = 'scratch operand']
  %s0 = inlined_call_operand.vmem [shape: f32[128,32], index: 0, kind: input, shape index: {}]
  %s1 = inlined_call_operand.vmem [shape: f32[96,128], index: 1, kind: input, shape index: {}]
  %s2 = inlined_call_operand.vmem [shape: f32[1,128], index: 2, kind: input, shape index: {}]
  %s3 = inlined_call_operand.hbm [shape: f32[128,128], index: 3, kind: output, shape index: {}]
  %s4 = sld [smem:[#allocation0]]
  $region22: #{tpu_custom_call.1} parent=0
    _
  %s6 = ssub.s32 1, %s4
  %s7 = scalar_select 0, %s6, %s4
  $region1: #{tpu_custom_call.1} parent=0
    #allocation3 [shape = 'u8[65536]{0}', space=vmem, size = 0x10000, scoped, tag = 'output window, operand 0, single buffered']
    #allocation4 [shape = 's32[1]{0}', space=sflag, size = 0x4, scoped, tag = 'scoped memory for tpu_custom_call.1']
    %8 = vsyncpa [#allocation4], 0
    // Predicated region
    $region2: #{tpu_custom_call.1} parent=1 // pred_check
      _
    $region3: #{tpu_custom_call.1} parent=1 // pred_check_branch
      %10 = sbr.rel (0) target = $region5
    $region4: #{tpu_custom_call.1} parent=1 // pred_region
      _
    $region5: #{tpu_custom_call.1} parent=1 // pred_fallthru
      _
    // Predicated region
    $region6: #{tpu_custom_call.1} parent=1 // pred_check
      _
    $region7: #{tpu_custom_call.1} parent=1 // pred_check_branch
      %12 = sbr.rel (0) target = $region9
    $region8: #{tpu_custom_call.1} parent=1 // pred_region
      _
    $region9: #{tpu_custom_call.1} parent=1 // pred_fallthru
      _
    // Predicated region
    $region10: #{tpu_custom_call.1} parent=1 // pred_check
      _
    $region11: #{tpu_custom_call.1} parent=1 // pred_check_branch
      %14 = sbr.rel (0) target = $region13
    $region12: #{tpu_custom_call.1} parent=1 // pred_region
      _
    $region13: #{tpu_custom_call.1} parent=1 // pred_fallthru
      _
    %v15 = vld [vmem:[%s0] sm:$0xff]
    %v16 = vld [vmem:[%s0 + $0x8] sm:$0xff]
    %v17 = vld [vmem:[%s0 + $0x10] sm:$0xff]
    %v18 = vld [vmem:[%s0 + $0x18] sm:$0xff]
    %v19 = vld [vmem:[%s0 + $0x20] sm:$0xff]
    %v20 = vld [vmem:[%s0 + $0x28] sm:$0xff]
    %v21 = vld [vmem:[%s0 + $0x30] sm:$0xff]
    %v22 = vld [vmem:[%s0 + $0x38] sm:$0xff]
    %v23 = vld [vmem:[%s0 + $0x40] sm:$0xff]
    %v24 = vld [vmem:[%s0 + $0x48] sm:$0xff]
    %v25 = vld [vmem:[%s0 + $0x50] sm:$0xff]
    %v26 = vld [vmem:[%s0 + $0x58] sm:$0xff]
    %v27 = vld [vmem:[%s0 + $0x60] sm:$0xff]
    %v28 = vld [vmem:[%s0 + $0x68] sm:$0xff]
    %v29 = vld [vmem:[%s0 + $0x70] sm:$0xff]
    %v30 = vld [vmem:[%s0 + $0x78] sm:$0xff]
    %vm31 = vcmask 261120
    %32 = vst.msk [vmem:[#allocation2] sm:$0xff] %vm31, %v15
    %33 = vst.msk [vmem:[#allocation2 + $0x8] sm:$0xff] %vm31, %v16
    %34 = vst.msk [vmem:[#allocation2 + $0x10] sm:$0xff] %vm31, %v17
    %35 = vst.msk [vmem:[#allocation2 + $0x18] sm:$0xff] %vm31, %v18
    %36 = vst.msk [vmem:[#allocation2 + $0x20] sm:$0xff] %vm31, %v19
    %37 = vst.msk [vmem:[#allocation2 + $0x28] sm:$0xff] %vm31, %v20
    %38 = vst.msk [vmem:[#allocation2 + $0x30] sm:$0xff] %vm31, %v21
    %39 = vst.msk [vmem:[#allocation2 + $0x38] sm:$0xff] %vm31, %v22
    %40 = vst.msk [vmem:[#allocation2 + $0x40] sm:$0xff] %vm31, %v23
    %41 = vst.msk [vmem:[#allocation2 + $0x48] sm:$0xff] %vm31, %v24
    %42 = vst.msk [vmem:[#allocation2 + $0x50] sm:$0xff] %vm31, %v25
    %43 = vst.msk [vmem:[#allocation2 + $0x58] sm:$0xff] %vm31, %v26
    %44 = vst.msk [vmem:[#allocation2 + $0x60] sm:$0xff] %vm31, %v27
    %45 = vst.msk [vmem:[#allocation2 + $0x68] sm:$0xff] %vm31, %v28
    %46 = vst.msk [vmem:[#allocation2 + $0x70] sm:$0xff] %vm31, %v29
    %47 = vst.msk [vmem:[#allocation2 + $0x78] sm:$0xff] %vm31, %v30
    %65 = vrot.lane.b32.xlu0 %v15, 32
    %v66 = vpop.permute.xlu0 %65
    %67 = vrot.lane.b32.xlu0 %v16, 32
    %v68 = vpop.permute.xlu0 %67
    %69 = vrot.lane.b32.xlu0 %v17, 32
    %v70 = vpop.permute.xlu0 %69
    %71 = vrot.lane.b32.xlu0 %v18, 32
    %v72 = vpop.permute.xlu0 %71
    %73 = vrot.lane.b32.xlu0 %v19, 32
    %v74 = vpop.permute.xlu0 %73
    %75 = vrot.lane.b32.xlu0 %v20, 32
    %v76 = vpop.permute.xlu0 %75
    %77 = vrot.lane.b32.xlu0 %v21, 32
    %v78 = vpop.permute.xlu0 %77
    %79 = vrot.lane.b32.xlu0 %v22, 32
    %v80 = vpop.permute.xlu0 %79
    %81 = vrot.lane.b32.xlu0 %v23, 32
    %v82 = vpop.permute.xlu0 %81
    %83 = vrot.lane.b32.xlu0 %v24, 32
    %v84 = vpop.permute.xlu0 %83
    %85 = vrot.lane.b32.xlu0 %v25, 32
    %v86 = vpop.permute.xlu0 %85
    %87 = vrot.lane.b32.xlu0 %v26, 32
    %v88 = vpop.permute.xlu0 %87
    %89 = vrot.lane.b32.xlu0 %v27, 32
    %v90 = vpop.permute.xlu0 %89
    %91 = vrot.lane.b32.xlu0 %v28, 32
    %v92 = vpop.permute.xlu0 %91
    %93 = vrot.lane.b32.xlu0 %v29, 32
    %v94 = vpop.permute.xlu0 %93
    %95 = vrot.lane.b32.xlu0 %v30, 32
    %v96 = vpop.permute.xlu0 %95
    %97 = vrot.lane.b32.xlu0 0.0, 32
    %v98 = vpop.permute.xlu0 %97
    %vm116 = vcmask 523521
    %117 = vst.msk [vmem:[#allocation2 - $0x1] sm:$0xfe] %vm116, %v66
    %vm118 = vcmask 523520
    %119 = vst.msk [vmem:[#allocation2 + $0x7] sm:$0xff] %vm118, %v68
    %120 = vst.msk [vmem:[#allocation2 + $0xf] sm:$0xff] %vm118, %v70
    %121 = vst.msk [vmem:[#allocation2 + $0x17] sm:$0xff] %vm118, %v72
    %122 = vst.msk [vmem:[#allocation2 + $0x1f] sm:$0xff] %vm118, %v74
    %123 = vst.msk [vmem:[#allocation2 + $0x27] sm:$0xff] %vm118, %v76
    %124 = vst.msk [vmem:[#allocation2 + $0x2f] sm:$0xff] %vm118, %v78
    %125 = vst.msk [vmem:[#allocation2 + $0x37] sm:$0xff] %vm118, %v80
    %126 = vst.msk [vmem:[#allocation2 + $0x3f] sm:$0xff] %vm118, %v82
    %127 = vst.msk [vmem:[#allocation2 + $0x47] sm:$0xff] %vm118, %v84
    %128 = vst.msk [vmem:[#allocation2 + $0x4f] sm:$0xff] %vm118, %v86
    %129 = vst.msk [vmem:[#allocation2 + $0x57] sm:$0xff] %vm118, %v88
    %130 = vst.msk [vmem:[#allocation2 + $0x5f] sm:$0xff] %vm118, %v90
    %131 = vst.msk [vmem:[#allocation2 + $0x67] sm:$0xff] %vm118, %v92
    %132 = vst.msk [vmem:[#allocation2 + $0x6f] sm:$0xff] %vm118, %v94
    %133 = vst.msk [vmem:[#allocation2 + $0x77] sm:$0xff] %vm118, %v96
    %vm134 = vcmask 516352
    %135 = vst.msk [vmem:[#allocation2 + $0x7f] sm:$0x1] %vm134, %v98
    %136 = vrot.lane.b32.xlu0 %v15, 64
    %v137 = vpop.permute.xlu0 %136
    %138 = vrot.lane.b32.xlu0 %v16, 64
    %v139 = vpop.permute.xlu0 %138
    %140 = vrot.lane.b32.xlu0 %v17, 64
    %v141 = vpop.permute.xlu0 %140
    %142 = vrot.lane.b32.xlu0 %v18, 64
    %v143 = vpop.permute.xlu0 %142
    %144 = vrot.lane.b32.xlu0 %v19, 64
    %v145 = vpop.permute.xlu0 %144
    %146 = vrot.lane.b32.xlu0 %v20, 64
    %v147 = vpop.permute.xlu0 %146
    %148 = vrot.lane.b32.xlu0 %v21, 64
    %v149 = vpop.permute.xlu0 %148
    %150 = vrot.lane.b32.xlu0 %v22, 64
    %v151 = vpop.permute.xlu0 %150
    %152 = vrot.lane.b32.xlu0 %v23, 64
    %v153 = vpop.permute.xlu0 %152
    %154 = vrot.lane.b32.xlu0 %v24, 64
    %v155 = vpop.permute.xlu0 %154
    %156 = vrot.lane.b32.xlu0 %v25, 64
    %v157 = vpop.permute.xlu0 %156
    %158 = vrot.lane.b32.xlu0 %v26, 64
    %v159 = vpop.permute.xlu0 %158
    %160 = vrot.lane.b32.xlu0 %v27, 64
    %v161 = vpop.permute.xlu0 %160
    %162 = vrot.lane.b32.xlu0 %v28, 64
    %v163 = vpop.permute.xlu0 %162
    %164 = vrot.lane.b32.xlu0 %v29, 64
    %v165 = vpop.permute.xlu0 %164
    %166 = vrot.lane.b32.xlu0 %v30, 64
    %v167 = vpop.permute.xlu0 %166
    %168 = vrot.lane.b32.xlu0 0.0, 64
    %v169 = vpop.permute.xlu0 %168
    %vm187 = vcmask 785922
    %188 = vst.msk [vmem:[#allocation2 - $0x2] sm:$0xfc] %vm187, %v137
    %vm189 = vcmask 785920
    %190 = vst.msk [vmem:[#allocation2 + $0x6] sm:$0xff] %vm189, %v139
    %191 = vst.msk [vmem:[#allocation2 + $0xe] sm:$0xff] %vm189, %v141
    %192 = vst.msk [vmem:[#allocation2 + $0x16] sm:$0xff] %vm189, %v143
    %193 = vst.msk [vmem:[#allocation2 + $0x1e] sm:$0xff] %vm189, %v145
    %194 = vst.msk [vmem:[#allocation2 + $0x26] sm:$0xff] %vm189, %v147
    %195 = vst.msk [vmem:[#allocation2 + $0x2e] sm:$0xff] %vm189, %v149
    %196 = vst.msk [vmem:[#allocation2 + $0x36] sm:$0xff] %vm189, %v151
    %197 = vst.msk [vmem:[#allocation2 + $0x3e] sm:$0xff] %vm189, %v153
    %198 = vst.msk [vmem:[#allocation2 + $0x46] sm:$0xff] %vm189, %v155
    %199 = vst.msk [vmem:[#allocation2 + $0x4e] sm:$0xff] %vm189, %v157
    %200 = vst.msk [vmem:[#allocation2 + $0x56] sm:$0xff] %vm189, %v159
    %201 = vst.msk [vmem:[#allocation2 + $0x5e] sm:$0xff] %vm189, %v161
    %202 = vst.msk [vmem:[#allocation2 + $0x66] sm:$0xff] %vm189, %v163
    %203 = vst.msk [vmem:[#allocation2 + $0x6e] sm:$0xff] %vm189, %v165
    %204 = vst.msk [vmem:[#allocation2 + $0x76] sm:$0xff] %vm189, %v167
    %vm205 = vcmask 779776
    %206 = vst.msk [vmem:[#allocation2 + $0x7e] sm:$0x3] %vm205, %v169
    %v207 = vld [vmem:[#allocation2] sm:$0xff]
    %v208 = vld [vmem:[#allocation2 + $0x8] sm:$0xff]
    %v209 = vld [vmem:[#allocation2 + $0x10] sm:$0xff]
    %v210 = vld [vmem:[#allocation2 + $0x18] sm:$0xff]
    %v211 = vld [vmem:[#allocation2 + $0x20] sm:$0xff]
    %v212 = vld [vmem:[#allocation2 + $0x28] sm:$0xff]
    %v213 = vld [vmem:[#allocation2 + $0x30] sm:$0xff]
    %v214 = vld [vmem:[#allocation2 + $0x38] sm:$0xff]
    %v215 = vld [vmem:[#allocation2 + $0x40] sm:$0xff]
    %v216 = vld [vmem:[#allocation2 + $0x48] sm:$0xff]
    %v217 = vld [vmem:[#allocation2 + $0x50] sm:$0xff]
    %v218 = vld [vmem:[#allocation2 + $0x58] sm:$0xff]
    %v219 = vld [vmem:[#allocation2 + $0x60] sm:$0xff]
    %v220 = vld [vmem:[#allocation2 + $0x68] sm:$0xff]
    %v221 = vld [vmem:[#allocation2 + $0x70] sm:$0xff]
    %v222 = vld [vmem:[#allocation2 + $0x78] sm:$0xff]
    %v223 = vld [vmem:[%s1] sm:$0xff]
    %v224 = vld [vmem:[%s1 + $0x8] sm:$0xff]
    %v225 = vld [vmem:[%s1 + $0x10] sm:$0xff]
    %v226 = vld [vmem:[%s1 + $0x18] sm:$0xff]
    %v227 = vld [vmem:[%s1 + $0x20] sm:$0xff]
    %v228 = vld [vmem:[%s1 + $0x28] sm:$0xff]
    %v229 = vld [vmem:[%s1 + $0x30] sm:$0xff]
    %v230 = vld [vmem:[%s1 + $0x38] sm:$0xff]
    %v231 = vld [vmem:[%s1 + $0x40] sm:$0xff]
    %v232 = vld [vmem:[%s1 + $0x48] sm:$0xff]
    %v233 = vld [vmem:[%s1 + $0x50] sm:$0xff]
    %v234 = vld [vmem:[%s1 + $0x58] sm:$0xff]
    %v235 = vld [vmem:[%s2] sm:$0x1]
    %v237 = vlaneseq
    %v238 = vshrl.u32 %v237, 7
    %v239 = vsub.s32 0, %v238
    %v240 = vrot.slane %v235, %v239
    %vm242 = vcmask 785408
    %v244 = vsel %vm242, %v207, 0
    %v247 = vsel %vm242, %v208, 0
    %v250 = vsel %vm242, %v209, 0
    %v253 = vsel %vm242, %v210, 0
    %v256 = vsel %vm242, %v211, 0
    %v259 = vsel %vm242, %v212, 0
    %v262 = vsel %vm242, %v213, 0
    %v265 = vsel %vm242, %v214, 0
    %v268 = vsel %vm242, %v215, 0
    %v271 = vsel %vm242, %v216, 0
    %v274 = vsel %vm242, %v217, 0
    %v277 = vsel %vm242, %v218, 0
    %v280 = vsel %vm242, %v219, 0
    %v283 = vsel %vm242, %v220, 0
    %v286 = vsel %vm242, %v221, 0
    %v289 = vsel %vm242, %v222, 0
    %291 = vmatprep.subr.mxu0 0.0
    %292 = vmatpush1.msra.mxu0 0.0
    %293 = vmatprep.subr.mxu0 0.0
    %294 = vmatpush1.msra.mxu0 0.0
    %295 = vmatprep.subr.mxu0 0.0
    %296 = vmatpush1.msra.mxu0 0.0
    %297 = vmatprep.subr.mxu0 0.0
    %298 = vmatpush1.msra.mxu0 0.0
    %299 = vmatprep.subr.mxu0 0.0
    %300 = vmatpush1.msra.mxu0 %v234
    %301 = vmatprep.subr.mxu0 0.0
    %302 = vmatpush1.msra.mxu0 %v233
    %303 = vmatprep.subr.mxu0 0.0
    %304 = vmatpush1.msra.mxu0 %v232
    %305 = vmatprep.subr.mxu0 0.0
    %306 = vmatpush1.msra.mxu0 %v231
    %307 = vmatprep.subr.mxu0 0.0
    %308 = vmatpush1.msra.mxu0 %v230
    %309 = vmatprep.subr.mxu0 0.0
    %310 = vmatpush1.msra.mxu0 %v229
    %311 = vmatprep.subr.mxu0 0.0
    %312 = vmatpush1.msra.mxu0 %v228
    %313 = vmatprep.subr.mxu0 0.0
    %314 = vmatpush1.msra.mxu0 %v227
    %315 = vmatprep.subr.mxu0 0.0
    %316 = vmatpush1.msra.mxu0 %v226
    %317 = vmatprep.subr.mxu0 0.0
    %318 = vmatpush1.msra.mxu0 %v225
    %319 = vmatprep.subr.mxu0 0.0
    %320 = vmatpush1.msra.mxu0 %v224
    %321 = vmatprep.subr.mxu0 0.0
    %322 = vmatpush1.msra.mxu0 %v223
    %323 = vmatprep.subr.mxu0 0.0
    %324 = vmatpush2.msra.mxu0 0.0
    %325 = vmatprep.subr.mxu0 0.0
    %326 = vmatpush2.msra.mxu0 0.0
    %327 = vmatprep.subr.mxu0 0.0
    %328 = vmatpush2.msra.mxu0 0.0
    %329 = vmatprep.subr.mxu0 0.0
    %330 = vmatpush2.msra.mxu0 0.0
    %331 = vmatprep.subr.mxu0 0.0
    %332 = vmatpush2.msra.mxu0 0.0
    %333 = vmatprep.subr.mxu0 0.0
    %334 = vmatpush2.msra.mxu0 0.0
    %335 = vmatprep.subr.mxu0 0.0
    %336 = vmatpush2.msra.mxu0 0.0
    %337 = vmatprep.subr.mxu0 0.0
    %338 = vmatpush2.msra.mxu0 0.0
    %339 = vmatprep.subr.mxu0 0.0
    %340 = vmatpush2.msra.mxu0 0.0
    %341 = vmatprep.subr.mxu0 0.0
    %342 = vmatpush2.msra.mxu0 0.0
    %343 = vmatprep.subr.mxu0 0.0
    %344 = vmatpush2.msra.mxu0 0.0
    %345 = vmatprep.subr.mxu0 0.0
    %346 = vmatpush2.msra.mxu0 0.0
    %347 = vmatprep.subr.mxu0 0.0
    %348 = vmatpush2.msra.mxu0 0.0
    %349 = vmatprep.subr.mxu0 0.0
    %350 = vmatpush2.msra.mxu0 0.0
    %351 = vmatprep.subr.mxu0 0.0
    %352 = vmatpush2.msra.mxu0 0.0
    %353 = vmatprep.subr.mxu0 0.0
    %354 = vmatpush2.msra.mxu0 0.0
    %355 = vmatprep.mubr.f32.mxu0 0.0
    %356 = vmatmul.mubr.f32.gmra.mxu0 %v244
    %v357 = vpop.f32.mrf.mxu0
    %v358 = vadd.f32 %v240, %v357
    %v359 = vpop.f32.mrf.mxu0
    %360 = vmatprep.mubr.f32.mxu0 0.0
    %361 = vmatmul.mubr.f32.gmra.mxu0 %v247
    %v362 = vpop.f32.mrf.mxu0
    %v363 = vadd.f32 %v240, %v362
    %v364 = vpop.f32.mrf.mxu0
    %365 = vmatprep.mubr.f32.mxu0 0.0
    %366 = vmatmul.mubr.f32.gmra.mxu0 %v250
    %v367 = vpop.f32.mrf.mxu0
    %v368 = vadd.f32 %v240, %v367
    %v369 = vpop.f32.mrf.mxu0
    %370 = vmatprep.mubr.f32.mxu0 0.0
    %371 = vmatmul.mubr.f32.gmra.mxu0 %v253
    %v372 = vpop.f32.mrf.mxu0
    %v373 = vadd.f32 %v240, %v372
    %v374 = vpop.f32.mrf.mxu0
    %375 = vmatprep.mubr.f32.mxu0 0.0
    %376 = vmatmul.mubr.f32.gmra.mxu0 %v256
    %v377 = vpop.f32.mrf.mxu0
    %v378 = vadd.f32 %v240, %v377
    %v379 = vpop.f32.mrf.mxu0
    %380 = vmatprep.mubr.f32.mxu0 0.0
    %381 = vmatmul.mubr.f32.gmra.mxu0 %v259
    %v382 = vpop.f32.mrf.mxu0
    %v383 = vadd.f32 %v240, %v382
    %v384 = vpop.f32.mrf.mxu0
    %385 = vmatprep.mubr.f32.mxu0 0.0
    %386 = vmatmul.mubr.f32.gmra.mxu0 %v262
    %v387 = vpop.f32.mrf.mxu0
    %v388 = vadd.f32 %v240, %v387
    %v389 = vpop.f32.mrf.mxu0
    %390 = vmatprep.mubr.f32.mxu0 0.0
    %391 = vmatmul.mubr.f32.gmra.mxu0 %v265
    %v392 = vpop.f32.mrf.mxu0
    %v393 = vadd.f32 %v240, %v392
    %v394 = vpop.f32.mrf.mxu0
    %395 = vmatprep.mubr.f32.mxu0 0.0
    %396 = vmatmul.mubr.f32.gmra.mxu0 %v268
    %v397 = vpop.f32.mrf.mxu0
    %v398 = vadd.f32 %v240, %v397
    %v399 = vpop.f32.mrf.mxu0
    %400 = vmatprep.mubr.f32.mxu0 0.0
    %401 = vmatmul.mubr.f32.gmra.mxu0 %v271
    %v402 = vpop.f32.mrf.mxu0
    %v403 = vadd.f32 %v240, %v402
    %v404 = vpop.f32.mrf.mxu0
    %405 = vmatprep.mubr.f32.mxu0 0.0
    %406 = vmatmul.mubr.f32.gmra.mxu0 %v274
    %v407 = vpop.f32.mrf.mxu0
    %v408 = vadd.f32 %v240, %v407
    %v409 = vpop.f32.mrf.mxu0
    %410 = vmatprep.mubr.f32.mxu0 0.0
    %411 = vmatmul.mubr.f32.gmra.mxu0 %v277
    %v412 = vpop.f32.mrf.mxu0
    %v413 = vadd.f32 %v240, %v412
    %v414 = vpop.f32.mrf.mxu0
    %415 = vmatprep.mubr.f32.mxu0 0.0
    %416 = vmatmul.mubr.f32.gmra.mxu0 %v280
    %v417 = vpop.f32.mrf.mxu0
    %v418 = vadd.f32 %v240, %v417
    %v419 = vpop.f32.mrf.mxu0
    %420 = vmatprep.mubr.f32.mxu0 0.0
    %421 = vmatmul.mubr.f32.gmra.mxu0 %v283
    %v422 = vpop.f32.mrf.mxu0
    %v423 = vadd.f32 %v240, %v422
    %v424 = vpop.f32.mrf.mxu0
    %425 = vmatprep.mubr.f32.mxu0 0.0
    %426 = vmatmul.mubr.f32.gmra.mxu0 %v286
    %v427 = vpop.f32.mrf.mxu0
    %v428 = vadd.f32 %v240, %v427
    %v429 = vpop.f32.mrf.mxu0
    %430 = vmatprep.mubr.f32.mxu0 0.0
    %431 = vmatmul.mubr.f32.gmra.mxu0 %v289
    %v432 = vpop.f32.mrf.mxu0
    %v433 = vadd.f32 %v240, %v432
    %v434 = vpop.f32.mrf.mxu0
    %435 = vdwg.mxu0
    %v436 = vmax.f32 %v358, 0.0
    %v437 = vmax.f32 %v363, 0.0
    %v438 = vmax.f32 %v368, 0.0
    %v439 = vmax.f32 %v373, 0.0
    %v440 = vmax.f32 %v378, 0.0
    %v441 = vmax.f32 %v383, 0.0
    %v442 = vmax.f32 %v388, 0.0
    %v443 = vmax.f32 %v393, 0.0
    %v444 = vmax.f32 %v398, 0.0
    %v445 = vmax.f32 %v403, 0.0
    %v446 = vmax.f32 %v408, 0.0
    %v447 = vmax.f32 %v413, 0.0
    %v448 = vmax.f32 %v418, 0.0
    %v449 = vmax.f32 %v423, 0.0
    %v450 = vmax.f32 %v428, 0.0
    %v451 = vmax.f32 %v433, 0.0
    %452 = vst [vmem:[#allocation3] sm:$0xff] %v436
    %453 = vst [vmem:[#allocation3 + $0x8] sm:$0xff] %v437
    %454 = vst [vmem:[#allocation3 + $0x10] sm:$0xff] %v438
    %455 = vst [vmem:[#allocation3 + $0x18] sm:$0xff] %v439
    %456 = vst [vmem:[#allocation3 + $0x20] sm:$0xff] %v440
    %457 = vst [vmem:[#allocation3 + $0x28] sm:$0xff] %v441
    %458 = vst [vmem:[#allocation3 + $0x30] sm:$0xff] %v442
    %459 = vst [vmem:[#allocation3 + $0x38] sm:$0xff] %v443
    %460 = vst [vmem:[#allocation3 + $0x40] sm:$0xff] %v444
    %461 = vst [vmem:[#allocation3 + $0x48] sm:$0xff] %v445
    %462 = vst [vmem:[#allocation3 + $0x50] sm:$0xff] %v446
    %463 = vst [vmem:[#allocation3 + $0x58] sm:$0xff] %v447
    %464 = vst [vmem:[#allocation3 + $0x60] sm:$0xff] %v448
    %465 = vst [vmem:[#allocation3 + $0x68] sm:$0xff] %v449
    %466 = vst [vmem:[#allocation3 + $0x70] sm:$0xff] %v450
    %467 = vst [vmem:[#allocation3 + $0x78] sm:$0xff] %v451
    // Predicated region
    $region14: #{tpu_custom_call.1} parent=1 // pred_check
      _
    $region15: #{tpu_custom_call.1} parent=1 // pred_check_branch
      %469 = sbr.rel (0) target = $region17
    $region16: #{tpu_custom_call.1} parent=1 // pred_region
      %s471 = ssub.s32 2048, 2048
      %472 = vsyncadd [#allocation4], %s471
      %s473 = sshll.u32 [#allocation3], 4
      %s474 = int_to_ptr.vmem [resolvable:$true] %s473
      %479 = dma.vmem_to_hbm [thread:$0]  %s474, 2048, %s3, [#allocation4], 128, 128, 8
    $region17: #{tpu_custom_call.1} parent=1 // pred_fallthru
      _
    // Predicated region
    $region18: #{tpu_custom_call.1} parent=1 // pred_check
      _
    $region19: #{tpu_custom_call.1} parent=1 // pred_check_branch
      %481 = sbr.rel (0) target = $region21
    $region20: #{tpu_custom_call.1} parent=1 // pred_region
      %482 = dma.done [#allocation4], 2048
    $region21: #{tpu_custom_call.1} parent=1 // pred_fallthru
      _
    %483 = vsyncpa [#allocation4], 1

</llo_original>
